<compile_context>
chip_gen: v5e
topology: v5e:2x2
jax: 0.10.0
libtpu: 0.0.40
codegen_flags: <defaults>
</compile_context>

<pallas_src>
import functools

import jax
import jax.numpy as jnp
from jax.experimental import pallas as pl
from jax.experimental.pallas import tpu as pltpu


def _round_up(x: int, m: int) -> int:
    return (x + m - 1) // m * m


# ----------------------------------------------------------------------------
# Fused MLP kernel: L x (matmul + bias + activation) in one body.
# refs layout: (x_ref, w_0..w_{L-1}, b_0..b_{L-1}, o_ref)
# ----------------------------------------------------------------------------
def _fused_mlp_kernel(*refs, activations):
    n_layers = len(activations)
    x_ref = refs[0]
    w_refs = refs[1:1 + n_layers]
    b_refs = refs[1 + n_layers:1 + 2 * n_layers]
    o_ref = refs[1 + 2 * n_layers]

    x = x_ref[...].astype(jnp.float32)                 # (B_tile, obs_size)
    for w_ref, b_ref, act in zip(w_refs, b_refs, activations):
        w = w_ref[...]                                 # f32 or bf16 (MXU operand)
        x = jnp.dot(x.astype(w.dtype), w, preferred_element_type=jnp.float32)
        x = x + b_ref[...].astype(jnp.float32)         # (1, Dout) broadcast, f32
        if act == "relu":
            x = jnp.maximum(x, 0.0)
        elif act == "tanh":
            x = jnp.tanh(x)
        elif act != "none":
            raise ValueError(f"unknown activation {act}")
    o_ref[...] = x.astype(o_ref.dtype)


# ----------------------------------------------------------------------------
# Parameter init (matches the PyTorch layer shapes / default Linear init style)
# ----------------------------------------------------------------------------
def init_ddpg_actor_params(key, obs_size, act_size, hidden=(128,)):
    dims = [obs_size] + list(hidden) + [act_size]
    params = []
    for d_in, d_out in zip(dims[:-1], dims[1:]):
        key, kw, kb = jax.random.split(key, 3)
        bound = 1.0 / jnp.sqrt(d_in)
        w = jax.random.uniform(kw, (d_in, d_out), jnp.float32, -bound, bound)
        b = jax.random.uniform(kb, (d_out,), jnp.float32, -bound, bound)
        params.append((w, b))
    return params


# ----------------------------------------------------------------------------
# One-time parameter preparation: pad hidden dims to 128 lanes, keep obs/act
# dims unpadded (they are full-extent BlockSpec dims), optionally cast the MXU
# operands (weights) to bf16. Done ONCE, not per forward call.
# ----------------------------------------------------------------------------
def prepare_ddpg_actor_params(params, use_tanh=True, mxu_dtype=jnp.float32):
    n = len(params)
    dims = [params[0][0].shape[0]] + [w.shape[1] for w, _ in params]
    # Pad only the *hidden* feature dims; first (obs) and last (act) stay exact.
    pdims = [dims[0]] + [_round_up(d, 128) for d in dims[1:-1]] + [dims[-1]]

    w_ps, b_ps = [], []
    for i, (w, b) in enumerate(params):
        din_p, dout_p = pdims[i], pdims[i + 1]
        wp = (jnp.zeros((din_p, dout_p), mxu_dtype)
              .at[: w.shape[0], : w.shape[1]].set(w.astype(mxu_dtype)))
        bp = jnp.zeros((1, dout_p), jnp.float32).at[0, : b.shape[0]].set(b)
        w_ps.append(wp)
        b_ps.append(bp)

    activations = tuple(
        "relu" if i < n - 1 else ("tanh" if use_tanh else "none") for i in range(n)
    )
    return {
        "w": tuple(w_ps),
        "b": tuple(b_ps),
        "activations": activations,
        "dims": tuple(dims),
    }


# ----------------------------------------------------------------------------
# Batch tiling: bound last-tile waste, guarantee >=2 grid steps for large B
# (v7x megacore), no padding at all for small B.
# ----------------------------------------------------------------------------
def _choose_batch_tiling(B, max_tile=512):
    if B <= 256:
        # Single full-extent tile: both block dims equal the array dims, so the
        # (8,128) rule does not apply and no batch padding is needed.
        return B, B, 1
    n_steps = max(pl.cdiv(B, max_tile), 2)           # >=2 steps -> both v7x TCs busy
    b_tile = _round_up(pl.cdiv(B, n_steps), 8)       # tight tile, <8 wasted rows/step
    b_pad = _round_up(B, b_tile)
    return b_tile, b_pad, b_pad // b_tile


# ----------------------------------------------------------------------------
# Forward: one fused pallas_call. Weights/biases have a constant index_map so
# they are DMA'd once and stay VMEM-resident across the batch grid.
# ----------------------------------------------------------------------------
def ddpg_actor_forward(prepared, obs, batch_tile=512):
    B, obs_size = obs.shape
    w_ps, b_ps = prepared["w"], prepared["b"]
    activations = prepared["activations"]
    act_size = prepared["dims"][-1]
    assert obs_size == prepared["dims"][0]

    b_tile, b_pad, n_steps = _choose_batch_tiling(B, batch_tile)

    # Only (small) batch-dim padding, never lane padding of the input.
    obs_in = obs if b_pad == B else jnp.zeros((b_pad, obs_size), obs.dtype).at[:B].set(obs)

    kernel = functools.partial(_fused_mlp_kernel, activations=activations)

    in_specs = [pl.BlockSpec((b_tile, obs_size), lambda i: (i, 0))]
    # Weights/biases: full-extent blocks, constant block index -> VMEM resident.
    in_specs += [pl.BlockSpec(tuple(w.shape), lambda i: (0, 0)) for w in w_ps]
    in_specs += [pl.BlockSpec(tuple(b.shape), lambda i: (0, 0)) for b in b_ps]
    out_spec = pl.BlockSpec((b_tile, act_size), lambda i: (i, 0))

    out = pl.pallas_call(
        kernel,
        out_shape=jax.ShapeDtypeStruct((b_pad, act_size), obs.dtype),
        grid=(n_steps,),
        in_specs=in_specs,
        out_specs=out_spec,
        compiler_params=pltpu.CompilerParams(
            dimension_semantics=("parallel",),   # batch axis -> megacore sharding
        ),
    )(obs_in, *w_ps, *b_ps)

    return out if b_pad == B else out[:B]


# ----------------------------------------------------------------------------
# Pure-JAX reference (mirrors the PyTorch module)
# ----------------------------------------------------------------------------
def ddpg_actor_reference(params, obs, use_tanh=True):
    x = obs
    n = len(params)
    for i, (w, b) in enumerate(params):
        x = x @ w + b
        if i < n - 1:
            x = jnp.maximum(x, 0.0)
        elif use_tanh:
            x = jnp.tanh(x)
    return x


if __name__ == "__main__":
    obs_size, act_size = 16, 8
    hidden = (128, 64)          # exercises input layer + hidden ModuleList + output

    key = jax.random.PRNGKey(0)
    key_params, key_obs, key_obs2 = jax.random.split(key, 3)
    params = init_ddpg_actor_params(key_params, obs_size, act_size, hidden)

    # ---- small batch: grid=(1,), no padding anywhere, exact f32 path ----
    obs = jax.random.normal(key_obs, (2, obs_size), jnp.float32)
    prep_f32 = prepare_ddpg_actor_params(params, use_tanh=True, mxu_dtype=jnp.float32)
    out = jax.block_until_ready(ddpg_actor_forward(prep_f32, obs))
    ref = ddpg_actor_reference(params, obs, use_tanh=True)
    assert out.shape == (2, act_size)
    assert jnp.allclose(out, ref, atol=1e-5, rtol=1e-5), "f32 small-batch mismatch"

    # ---- larger batch: 2 grid steps (megacore path), batch-only padding ----
    obs2 = jax.random.normal(key_obs2, (260, obs_size), jnp.float32)
    out2 = jax.block_until_ready(ddpg_actor_forward(prep_f32, obs2))
    ref2 = ddpg_actor_reference(params, obs2, use_tanh=True)
    assert out2.shape == (260, act_size)
    assert jnp.allclose(out2, ref2, atol=1e-5, rtol=1e-5), "f32 tiled-batch mismatch"

    # ---- bf16 MXU-operand path (v6e/v7x fast path), f32 accumulation ----
    prep_bf16 = prepare_ddpg_actor_params(params, use_tanh=True, mxu_dtype=jnp.bfloat16)
    out2_bf16 = jax.block_until_ready(ddpg_actor_forward(prep_bf16, obs2))
    assert jnp.allclose(out2_bf16, ref2, atol=5e-2, rtol=5e-2), "bf16 mismatch"

    print("KERNEL_OK")
</pallas_src>

<mosaic_0001>
module attributes {stable_mosaic.version = 11 : i64} {
  func.func @_fused_mlp_kernel(%arg0: i32, %arg1: memref<2x16xf32, #tpu.memory_space<vmem>>, %arg2: memref<16x128xf32, #tpu.memory_space<vmem>>, %arg3: memref<128x128xf32, #tpu.memory_space<vmem>>, %arg4: memref<128x8xf32, #tpu.memory_space<vmem>>, %arg5: memref<1x128xf32, #tpu.memory_space<vmem>>, %arg6: memref<1x128xf32, #tpu.memory_space<vmem>>, %arg7: memref<1x8xf32, #tpu.memory_space<vmem>>, %arg8: memref<2x8xf32, #tpu.memory_space<vmem>>) attributes {dimension_semantics = [#tpu.dimension_semantics<parallel>], iteration_bounds = array<i64: 1>, scalar_prefetch = 0 : i64, scratch_operands = 0 : i64, tpu.core_type = #tpu.core_type<tc>, window_params = [{transform_indices = @transform_0, window_bounds = array<i64: 2, 16>}, {pipeline_mode = #tpu.pipeline_mode<synchronous>, transform_indices = @transform_1, window_bounds = array<i64: 16, 128>}, {pipeline_mode = #tpu.pipeline_mode<synchronous>, transform_indices = @transform_2, window_bounds = array<i64: 128, 128>}, {pipeline_mode = #tpu.pipeline_mode<synchronous>, transform_indices = @transform_3, window_bounds = array<i64: 128, 8>}, {pipeline_mode = #tpu.pipeline_mode<synchronous>, transform_indices = @transform_4, window_bounds = array<i64: 1, 128>}, {pipeline_mode = #tpu.pipeline_mode<synchronous>, transform_indices = @transform_5, window_bounds = array<i64: 1, 128>}, {pipeline_mode = #tpu.pipeline_mode<synchronous>, transform_indices = @transform_6, window_bounds = array<i64: 1, 8>}, {transform_indices = @transform_7, window_bounds = array<i64: 2, 8>}]} {
    %c0 = arith.constant 0 : index
    %c0_0 = arith.constant 0 : index
    %0 = vector.load %arg1[%c0, %c0_0] : memref<2x16xf32, #tpu.memory_space<vmem>>, vector<2x16xf32>
    %c0_1 = arith.constant 0 : index
    %c0_2 = arith.constant 0 : index
    %1 = vector.load %arg2[%c0_1, %c0_2] : memref<16x128xf32, #tpu.memory_space<vmem>>, vector<16x128xf32>
    %cst = arith.constant dense<0.000000e+00> : vector<2x128xf32>
    %2 = tpu.matmul %0, %1, %cst {dimension_numbers = #tpu.dot_dimension_numbers<[1], [0], [0], [1], [0, 0, 1, 1], [], []>} : vector<2x16xf32>, vector<16x128xf32>, vector<2x128xf32> -> vector<2x128xf32>
    %c0_3 = arith.constant 0 : index
    %c0_4 = arith.constant 0 : index
    %3 = vector.load %arg5[%c0_3, %c0_4] : memref<1x128xf32, #tpu.memory_space<vmem>>, vector<1x128xf32>
    %4 = vector.broadcast %3 : vector<1x128xf32> to vector<2x128xf32>
    %5 = arith.addf %2, %4 : vector<2x128xf32>
    %cst_5 = arith.constant 0.000000e+00 : f32
    %6 = vector.broadcast %cst_5 : f32 to vector<2x128xf32>
    %7 = arith.maximumf %5, %6 : vector<2x128xf32>
    %c0_6 = arith.constant 0 : index
    %c0_7 = arith.constant 0 : index
    %8 = vector.load %arg3[%c0_6, %c0_7] : memref<128x128xf32, #tpu.memory_space<vmem>>, vector<128x128xf32>
    %cst_8 = arith.constant dense<0.000000e+00> : vector<2x128xf32>
    %9 = tpu.matmul %7, %8, %cst_8 {dimension_numbers = #tpu.dot_dimension_numbers<[1], [0], [0], [1], [0, 0, 1, 1], [], []>} : vector<2x128xf32>, vector<128x128xf32>, vector<2x128xf32> -> vector<2x128xf32>
    %c0_9 = arith.constant 0 : index
    %c0_10 = arith.constant 0 : index
    %10 = vector.load %arg6[%c0_9, %c0_10] : memref<1x128xf32, #tpu.memory_space<vmem>>, vector<1x128xf32>
    %11 = vector.broadcast %10 : vector<1x128xf32> to vector<2x128xf32>
    %12 = arith.addf %9, %11 : vector<2x128xf32>
    %cst_11 = arith.constant 0.000000e+00 : f32
    %13 = vector.broadcast %cst_11 : f32 to vector<2x128xf32>
    %14 = arith.maximumf %12, %13 : vector<2x128xf32>
    %c0_12 = arith.constant 0 : index
    %c0_13 = arith.constant 0 : index
    %15 = vector.load %arg4[%c0_12, %c0_13] : memref<128x8xf32, #tpu.memory_space<vmem>>, vector<128x8xf32>
    %cst_14 = arith.constant dense<0.000000e+00> : vector<2x8xf32>
    %16 = tpu.matmul %14, %15, %cst_14 {dimension_numbers = #tpu.dot_dimension_numbers<[1], [0], [0], [1], [0, 0, 1, 1], [], []>} : vector<2x128xf32>, vector<128x8xf32>, vector<2x8xf32> -> vector<2x8xf32>
    %c0_15 = arith.constant 0 : index
    %c0_16 = arith.constant 0 : index
    %17 = vector.load %arg7[%c0_15, %c0_16] : memref<1x8xf32, #tpu.memory_space<vmem>>, vector<1x8xf32>
    %18 = vector.broadcast %17 : vector<1x8xf32> to vector<2x8xf32>
    %19 = arith.addf %16, %18 : vector<2x8xf32>
    %20 = math.tanh %19 : vector<2x8xf32>
    %c0_17 = arith.constant 0 : index
    %c0_18 = arith.constant 0 : index
    %21 = vector.load %arg8[%c0_17, %c0_18] : memref<2x8xf32, #tpu.memory_space<vmem>>, vector<2x8xf32>
    tpu.vector_store %arg8[%c0_17, %c0_18], %20 {strides = array<i32>} : memref<2x8xf32, #tpu.memory_space<vmem>>, vector<2x8xf32>,
    return
  }
  func.func @transform_0(%arg0: i32) -> (i32, i32) {
    %c0_i32 = arith.constant 0 : i32
    %c0_i32_0 = arith.constant 0 : i32
    return %arg0, %c0_i32 : i32, i32
  }
  func.func @transform_1(%arg0: i32) -> (i32, i32) {
    %c0_i32 = arith.constant 0 : i32
    %c0_i32_0 = arith.constant 0 : i32
    %c0_i32_1 = arith.constant 0 : i32
    return %c0_i32, %c0_i32_0 : i32, i32
  }
  func.func @transform_2(%arg0: i32) -> (i32, i32) {
    %c0_i32 = arith.constant 0 : i32
    %c0_i32_0 = arith.constant 0 : i32
    %c0_i32_1 = arith.constant 0 : i32
    return %c0_i32, %c0_i32_0 : i32, i32
  }
  func.func @transform_3(%arg0: i32) -> (i32, i32) {
    %c0_i32 = arith.constant 0 : i32
    %c0_i32_0 = arith.constant 0 : i32
    %c0_i32_1 = arith.constant 0 : i32
    return %c0_i32, %c0_i32_0 : i32, i32
  }
  func.func @transform_4(%arg0: i32) -> (i32, i32) {
    %c0_i32 = arith.constant 0 : i32
    %c0_i32_0 = arith.constant 0 : i32
    %c0_i32_1 = arith.constant 0 : i32
    return %c0_i32, %c0_i32_0 : i32, i32
  }
  func.func @transform_5(%arg0: i32) -> (i32, i32) {
    %c0_i32 = arith.constant 0 : i32
    %c0_i32_0 = arith.constant 0 : i32
    %c0_i32_1 = arith.constant 0 : i32
    return %c0_i32, %c0_i32_0 : i32, i32
  }
  func.func @transform_6(%arg0: i32) -> (i32, i32) {
    %c0_i32 = arith.constant 0 : i32
    %c0_i32_0 = arith.constant 0 : i32
    %c0_i32_1 = arith.constant 0 : i32
    return %c0_i32, %c0_i32_0 : i32, i32
  }
  func.func @transform_7(%arg0: i32) -> (i32, i32) {
    %c0_i32 = arith.constant 0 : i32
    %c0_i32_0 = arith.constant 0 : i32
    return %arg0, %c0_i32 : i32, i32
  }
}

</mosaic_0001>

<llo_original>
// kernel: tpu_custom_call.1
$region0: #{tpu_custom_call.1}
  #allocation0 [shape = 'u32[]', space=smem, size = 0x4, offset = 0x4, fixed_abs, tag = 'smem constant byte address 0x4 - core index']
  #allocation1 [shape = 'u32[72,128]{1,0:T(1,128)}', space=vmem, size = 0x9000, scoped, tag = 'internal scratch']
  %s0 = inlined_call_operand.vmem [shape: f32[2,16], index: 0, kind: input, shape index: {}]
  %s1 = inlined_call_operand.hbm [shape: f32[16,128], index: 1, kind: input, shape index: {}]
  %s2 = inlined_call_operand.vmem [shape: f32[128,128], index: 2, kind: input, shape index: {}]
  %s3 = inlined_call_operand.vmem [shape: f32[128,8], index: 3, kind: input, shape index: {}]
  %s4 = inlined_call_operand.vmem [shape: f32[1,128], index: 4, kind: input, shape index: {}]
  %s5 = inlined_call_operand.vmem [shape: f32[1,128], index: 5, kind: input, shape index: {}]
  %s6 = inlined_call_operand.vmem [shape: f32[1,8], index: 6, kind: input, shape index: {}]
  %s7 = inlined_call_operand.hbm [shape: f32[2,8], index: 7, kind: output, shape index: {}]
  %s8 = sld [smem:[#allocation0]]
  $region42: #{tpu_custom_call.1} parent=0
    _
  %s10 = ssub.s32 1, %s8
  %s11 = scalar_select 0, %s10, %s8
  $region1: #{tpu_custom_call.1} parent=0
    #allocation2 [shape = 'u8[8192]{0}', space=vmem, size = 0x2000, scoped, tag = 'input window, operand 1, single buffered']
    #allocation3 [shape = 's32[1]{0}', space=sflag, size = 0x4, scoped, tag = 'scoped memory for tpu_custom_call.1']
    #allocation4 [shape = 's32[1]{0}', space=sflag, size = 0x4, scoped, tag = 'scoped memory for tpu_custom_call.1']
    #allocation5 [shape = 'u8[1024]{0}', space=vmem, size = 0x400, scoped, tag = 'output window, operand 0, single buffered']
    %12 = vsyncpa [#allocation3], 0
    %13 = vsyncpa [#allocation4], 0
    // Predicated region
    $region2: #{tpu_custom_call.1} parent=1 // pred_check
      _
    $region3: #{tpu_custom_call.1} parent=1 // pred_check_branch
      %15 = sbr.rel (0) target = $region5
    $region4: #{tpu_custom_call.1} parent=1 // pred_region
      _
    $region5: #{tpu_custom_call.1} parent=1 // pred_fallthru
      _
    // Predicated region
    $region6: #{tpu_custom_call.1} parent=1 // pred_check
      _
    $region7: #{tpu_custom_call.1} parent=1 // pred_check_branch
      %17 = sbr.rel (0) target = $region9
    $region8: #{tpu_custom_call.1} parent=1 // pred_region
      %19 = vsyncadd [#allocation3], 0
      %s20 = sshll.u32 %s1, 4
      %s21 = int_to_ptr.hbm [resolvable:$true] %s20
      %s22 = sshll.u32 [#allocation2], 4
      %s23 = int_to_ptr.vmem [resolvable:$true] %s22
      %28 = dma.hbm_to_vmem [thread:$0]  %s21, 256, %s23, [#allocation3], 128, 128, 8
    $region9: #{tpu_custom_call.1} parent=1 // pred_fallthru
      _
    // Predicated region
    $region10: #{tpu_custom_call.1} parent=1 // pred_check
      _
    $region11: #{tpu_custom_call.1} parent=1 // pred_check_branch
      %30 = sbr.rel (0) target = $region13
    $region12: #{tpu_custom_call.1} parent=1 // pred_region
      _
    $region13: #{tpu_custom_call.1} parent=1 // pred_fallthru
      _
    // Predicated region
    $region14: #{tpu_custom_call.1} parent=1 // pred_check
      _
    $region15: #{tpu_custom_call.1} parent=1 // pred_check_branch
      %32 = sbr.rel (0) target = $region17
    $region16: #{tpu_custom_call.1} parent=1 // pred_region
      _
    $region17: #{tpu_custom_call.1} parent=1 // pred_fallthru
      _
    // Predicated region
    $region18: #{tpu_custom_call.1} parent=1 // pred_check
      _
    $region19: #{tpu_custom_call.1} parent=1 // pred_check_branch
      %34 = sbr.rel (0) target = $region21
    $region20: #{tpu_custom_call.1} parent=1 // pred_region
      _
    $region21: #{tpu_custom_call.1} parent=1 // pred_fallthru
      _
    // Predicated region
    $region22: #{tpu_custom_call.1} parent=1 // pred_check
      _
    $region23: #{tpu_custom_call.1} parent=1 // pred_check_branch
      %36 = sbr.rel (0) target = $region25
    $region24: #{tpu_custom_call.1} parent=1 // pred_region
      _
    $region25: #{tpu_custom_call.1} parent=1 // pred_fallthru
      _
    // Predicated region
    $region26: #{tpu_custom_call.1} parent=1 // pred_check
      _
    $region27: #{tpu_custom_call.1} parent=1 // pred_check_branch
      %38 = sbr.rel (0) target = $region29
    $region28: #{tpu_custom_call.1} parent=1 // pred_region
      _
    $region29: #{tpu_custom_call.1} parent=1 // pred_fallthru
      _
    // Predicated region
    $region30: #{tpu_custom_call.1} parent=1 // pred_check
      _
    $region31: #{tpu_custom_call.1} parent=1 // pred_check_branch
      %40 = sbr.rel (0) target = $region33
    $region32: #{tpu_custom_call.1} parent=1 // pred_region
      %42 = dma.done [#allocation3], 256
    $region33: #{tpu_custom_call.1} parent=1 // pred_fallthru
      _
    %v43 = vld [vmem:[%s0] sm:$0x3]
    %v44 = vld [vmem:[#allocation2] sm:$0xff]
    %v45 = vld [vmem:[#allocation2 + $0x8] sm:$0xff]
    %v46 = vld [vmem:[%s4] sm:$0x1]
    %v48 = vperm.slane %v46, 0
    %vm50 = vcmask 130048
    %v52 = vsel %vm50, %v43, 0
    %54 = vmatpush.msra.mxu0 0.0
    %55 = vmatpush.msra.mxu0 0.0
    %56 = vmatpush.msra.mxu0 0.0
    %57 = vmatpush.msra.mxu0 0.0
    %58 = vmatpush.msra.mxu0 0.0
    %59 = vmatpush.msra.mxu0 0.0
    %60 = vmatpush.msra.mxu0 0.0
    %61 = vmatpush.msra.mxu0 0.0
    %62 = vmatpush.msra.mxu0 0.0
    %63 = vmatpush.msra.mxu0 0.0
    %64 = vmatpush.msra.mxu0 0.0
    %65 = vmatpush.msra.mxu0 0.0
    %66 = vmatpush.msra.mxu0 0.0
    %67 = vmatpush.msra.mxu0 0.0
    %68 = vmatpush.msra.mxu0 %v45
    %69 = vmatpush.msra.mxu0 %v44
    %70 = vmatmul.f32.gmra.mxu0 %v52
    %v71 = vpop.f32.mrf.mxu0
    %v72 = vadd.f32 %v48, %v71
    %73 = vdwg.mxu0
    %v74 = vmax.f32 %v72, 0.0
    %v75 = vld [vmem:[%s2] sm:$0xff]
    %v76 = vld [vmem:[%s2 + $0x8] sm:$0xff]
    %v77 = vld [vmem:[%s2 + $0x10] sm:$0xff]
    %v78 = vld [vmem:[%s2 + $0x18] sm:$0xff]
    %v79 = vld [vmem:[%s2 + $0x20] sm:$0xff]
    %v80 = vld [vmem:[%s2 + $0x28] sm:$0xff]
    %v81 = vld [vmem:[%s2 + $0x30] sm:$0xff]
    %v82 = vld [vmem:[%s2 + $0x38] sm:$0xff]
    %v83 = vld [vmem:[%s2 + $0x40] sm:$0xff]
    %v84 = vld [vmem:[%s2 + $0x48] sm:$0xff]
    %v85 = vld [vmem:[%s2 + $0x50] sm:$0xff]
    %v86 = vld [vmem:[%s2 + $0x58] sm:$0xff]
    %v87 = vld [vmem:[%s2 + $0x60] sm:$0xff]
    %v88 = vld [vmem:[%s2 + $0x68] sm:$0xff]
    %v89 = vld [vmem:[%s2 + $0x70] sm:$0xff]
    %v90 = vld [vmem:[%s2 + $0x78] sm:$0xff]
    %v91 = vld [vmem:[%s5] sm:$0x1]
    %v93 = vperm.slane %v91, 0
    %95 = vmatpush.msra.mxu0 %v90
    %96 = vmatpush.msra.mxu0 %v89
    %97 = vmatpush.msra.mxu0 %v88
    %98 = vmatpush.msra.mxu0 %v87
    %99 = vmatpush.msra.mxu0 %v86
    %100 = vmatpush.msra.mxu0 %v85
    %101 = vmatpush.msra.mxu0 %v84
    %102 = vmatpush.msra.mxu0 %v83
    %103 = vmatpush.msra.mxu0 %v82
    %104 = vmatpush.msra.mxu0 %v81
    %105 = vmatpush.msra.mxu0 %v80
    %106 = vmatpush.msra.mxu0 %v79
    %107 = vmatpush.msra.mxu0 %v78
    %108 = vmatpush.msra.mxu0 %v77
    %109 = vmatpush.msra.mxu0 %v76
    %110 = vmatpush.msra.mxu0 %v75
    %111 = vmatmul.f32.gmra.mxu0 %v74
    %v112 = vpop.f32.mrf.mxu0
    %v113 = vadd.f32 %v93, %v112
    %114 = vdwg.mxu0
    %v115 = vmax.f32 %v113, 0.0
    %v116 = vld [vmem:[%s3] sm:$0xff]
    %v117 = vld [vmem:[%s3 + $0x8] sm:$0xff]
    %v118 = vld [vmem:[%s3 + $0x10] sm:$0xff]
    %v119 = vld [vmem:[%s3 + $0x18] sm:$0xff]
    %v120 = vld [vmem:[%s3 + $0x20] sm:$0xff]
    %v121 = vld [vmem:[%s3 + $0x28] sm:$0xff]
    %v122 = vld [vmem:[%s3 + $0x30] sm:$0xff]
    %v123 = vld [vmem:[%s3 + $0x38] sm:$0xff]
    %v124 = vld [vmem:[%s3 + $0x40] sm:$0xff]
    %v125 = vld [vmem:[%s3 + $0x48] sm:$0xff]
    %v126 = vld [vmem:[%s3 + $0x50] sm:$0xff]
    %v127 = vld [vmem:[%s3 + $0x58] sm:$0xff]
    %v128 = vld [vmem:[%s3 + $0x60] sm:$0xff]
    %v129 = vld [vmem:[%s3 + $0x68] sm:$0xff]
    %v130 = vld [vmem:[%s3 + $0x70] sm:$0xff]
    %v131 = vld [vmem:[%s3 + $0x78] sm:$0xff]
    %v132 = vld [vmem:[%s6] sm:$0x1]
    %v134 = vperm.slane %v132, 0
    %136 = vmatpush.msra.mxu0 %v131
    %137 = vmatpush.msra.mxu0 %v130
    %138 = vmatpush.msra.mxu0 %v129
    %139 = vmatpush.msra.mxu0 %v128
    %140 = vmatpush.msra.mxu0 %v127
    %141 = vmatpush.msra.mxu0 %v126
    %142 = vmatpush.msra.mxu0 %v125
    %143 = vmatpush.msra.mxu0 %v124
    %144 = vmatpush.msra.mxu0 %v123
    %145 = vmatpush.msra.mxu0 %v122
    %146 = vmatpush.msra.mxu0 %v121
    %147 = vmatpush.msra.mxu0 %v120
    %148 = vmatpush.msra.mxu0 %v119
    %149 = vmatpush.msra.mxu0 %v118
    %150 = vmatpush.msra.mxu0 %v117
    %151 = vmatpush.msra.mxu0 %v116
    %152 = vmatmul.f32.gmra.mxu0 %v115
    %v153 = vpop.f32.mrf.mxu0
    %v154 = vadd.f32 %v134, %v153
    %155 = vdwg.mxu0
    %v156 = vtanh.pop %v154
    %vm157 = vcmask 58368
    %158 = vst.msk [vmem:[#allocation5] sm:$0x3] %vm157, %v156
    // Predicated region
    $region34: #{tpu_custom_call.1} parent=1 // pred_check
      _
    $region35: #{tpu_custom_call.1} parent=1 // pred_check_branch
      %160 = sbr.rel (0) target = $region37
    $region36: #{tpu_custom_call.1} parent=1 // pred_region
      %162 = vsyncadd [#allocation4], 0
      %s164 = sshll.u32 [#allocation5], 4
      %s165 = int_to_ptr.vmem [resolvable:$true] %s164
      %s166 = sshll.u32 %s7, 4
      %s167 = int_to_ptr.hbm [resolvable:$true] %s166
      %169 = dma.vmem_to_hbm [thread:$0]  %s165, 32, %s167, [#allocation4]
    $region37: #{tpu_custom_call.1} parent=1 // pred_fallthru
      _
    // Predicated region
    $region38: #{tpu_custom_call.1} parent=1 // pred_check
      _
    $region39: #{tpu_custom_call.1} parent=1 // pred_check_branch
      %171 = sbr.rel (0) target = $region41
    $region40: #{tpu_custom_call.1} parent=1 // pred_region
      %173 = dma.done [#allocation4], 32
    $region41: #{tpu_custom_call.1} parent=1 // pred_fallthru
      _
    %174 = vsyncpa [#allocation3], 1
    %175 = vsyncpa [#allocation4], 1

</llo_original>
